<compile_context>
chip_gen: v7x
topology: tpu7x:2x2x1
jax: 0.10.0
libtpu: 0.0.40
codegen_flags: <defaults>
</compile_context>

<pallas_src>
import functools

import jax
import jax.numpy as jnp
from jax.experimental import pallas as pl
from jax.experimental.pallas import tpu as pltpu


def _round_up(x, m):
    return ((x + m - 1) // m) * m


def _ce_label_smooth_kernel(logits_ref, targets_ref, out_ref,
                            m_ref, l_ref, sx_ref, tx_ref,
                            *, epsilon, num_classes, mask_classes):
    # logits_ref : (TB, TC) f32/bf16  (tile of the logits)
    # targets_ref: (TB, 1)  int32     (class index per row)
    # out_ref    : (TB, 1)  f32       (per-row un-normalized loss)
    # scratch    : (TB, 1)  f32 each: running max, sum-exp, sum-x, target-x
    j = pl.program_id(1)
    n_class_steps = pl.num_programs(1)

    @pl.when(j == 0)
    def _init():
        m_ref[...] = jnp.full_like(m_ref, -jnp.inf)
        l_ref[...] = jnp.zeros_like(l_ref)
        sx_ref[...] = jnp.zeros_like(sx_ref)
        tx_ref[...] = jnp.zeros_like(tx_ref)

    x = logits_ref[...].astype(jnp.float32)                    # (TB, TC)
    tb, tc = x.shape

    # Tile-local lane index (loop-invariant -> hoistable by the compiler).
    col = jax.lax.broadcasted_iota(jnp.int32, (tb, tc), 1)

    # --- gather the target logit: per-row scalar shift, no global iota -----
    tgt_local = targets_ref[...] - j * tc                      # (TB, 1)
    hit = col == tgt_local          # never true on padded lanes / padded rows
    tx_ref[...] += jnp.sum(jnp.where(hit, x, 0.0), axis=1, keepdims=True)

    # --- online softmax + sum-of-logits accumulation -----------------------
    def accumulate(x_for_max, x_for_sum):
        m_prev = m_ref[...]                                    # (TB, 1)
        m_new = jnp.maximum(m_prev,
                            jnp.max(x_for_max, axis=1, keepdims=True))
        alpha = jnp.exp(m_prev - m_new)                        # rescale old sum
        p = jnp.exp(x_for_max - m_new)                         # padded lanes -> 0
        l_ref[...] = alpha * l_ref[...] + jnp.sum(p, axis=1, keepdims=True)
        m_ref[...] = m_new
        sx_ref[...] += jnp.sum(x_for_sum, axis=1, keepdims=True)

    if mask_classes:
        # Ragged C: only the LAST class tile has padded lanes, so only that
        # step pays for the compare + selects.
        @pl.when(j < n_class_steps - 1)
        def _dense():
            accumulate(x, x)

        @pl.when(j == n_class_steps - 1)
        def _ragged():
            valid = col < (num_classes - j * tc)
            accumulate(jnp.where(valid, x, -jnp.inf),
                       jnp.where(valid, x, 0.0))
    else:
        accumulate(x, x)

    # --- finalize at the last class step ------------------------------------
    @pl.when(j == n_class_steps - 1)
    def _finalize():
        lse = m_ref[...] + jnp.log(l_ref[...])                 # (TB, 1)
        c = jnp.float32(num_classes)
        tgt_term = (1.0 - epsilon) * (tx_ref[...] - lse)
        uni_term = (epsilon / num_classes) * (sx_ref[...] - c * lse)
        out_ref[...] = -(tgt_term + uni_term)


def _vmem_capacity_bytes():
    try:
        return int(pltpu.get_tpu_info().vmem_capacity_bytes)
    except Exception:
        return 64 << 20   # conservative (v7x-sized) fallback


def _pick_tiles(B, C, itemsize, vmem_phys):
    # Cap one logits block at min(16 MiB, VMEM/5) so the default
    # double-buffering stays well within physical VMEM on every generation
    # (v7x 64 MiB -> ~12 MiB block; v5e/v6e 128 MiB -> 16 MiB block).
    max_block_bytes = min(16 << 20, vmem_phys // 5)

    # Batch (sublane) tile: multiple of 8; split into >=2 tiles when B allows
    # so the "parallel" grid axis can shard across v7x's two TensorCores.
    b8 = _round_up(B, 8)
    if b8 >= 16:
        batch_tile = min(512, _round_up((B + 1) // 2, 8))
    else:
        batch_tile = b8

    # Class (lane) tile: full C if it fits the block budget, else the largest
    # multiple of 128 that does.
    if batch_tile * C * itemsize <= max_block_bytes:
        class_tile = C
    else:
        class_tile = max(
            128, (max_block_bytes // (batch_tile * itemsize)) // 128 * 128)
    return batch_tile, class_tile


def cross_entropy_label_smooth(inputs, targets, *, num_classes, epsilon=0.1,
                               batch_tile=None, class_tile=None):
    """Label-smoothed cross entropy.

    inputs : (B, num_classes) logits (f32 or bf16).
    targets: (B,) int class labels.
    Returns a scalar f32 loss == sum_c mean_b(-smooth_targets * log_softmax).
    """
    B, C = inputs.shape
    assert C == num_classes

    itemsize = jnp.dtype(inputs.dtype).itemsize
    vmem_phys = _vmem_capacity_bytes()
    tb_def, tc_def = _pick_tiles(B, C, itemsize, vmem_phys)
    if batch_tile is None:
        batch_tile = tb_def
    if class_tile is None:
        class_tile = tc_def
    if class_tile != C:
        assert class_tile % 128 == 0, "class tile must be a multiple of 128"
    assert batch_tile % 8 == 0, "batch tile must be a multiple of 8"

    # Pad the batch so it divides evenly; padded rows are sliced off before
    # the final reduction, so their (finite) per-row losses never contribute.
    Bp = _round_up(B, batch_tile)
    if Bp != B:
        inputs = jnp.pad(inputs, ((0, Bp - B), (0, 0)))
        targets = jnp.pad(targets, ((0, Bp - B),))
    targets_col = targets.astype(jnp.int32).reshape(Bp, 1)

    n_batch_tiles = Bp // batch_tile
    n_class_tiles = pl.cdiv(C, class_tile)
    mask_classes = (C % class_tile) != 0

    # Raise the scoped-VMEM limit to cover the double-buffered logits block
    # (+ headroom), capped at 3/4 of physical VMEM.  v5e's scoped default is
    # only 16 MiB; v7x only has 64 MiB physical.
    block_bytes = batch_tile * class_tile * itemsize
    vmem_limit_bytes = int(max(32 << 20,
                               min(vmem_phys * 3 // 4,
                                   2 * block_bytes + (8 << 20))))

    kernel = functools.partial(
        _ce_label_smooth_kernel,
        epsilon=float(epsilon),
        num_classes=int(num_classes),
        mask_classes=mask_classes,
    )

    per_row = pl.pallas_call(
        kernel,
        out_shape=jax.ShapeDtypeStruct((Bp, 1), jnp.float32),
        grid_spec=pltpu.PrefetchScalarGridSpec(
            num_scalar_prefetch=0,
            grid=(n_batch_tiles, n_class_tiles),
            in_specs=[
                pl.BlockSpec((batch_tile, class_tile), lambda i, j: (i, j)),
                pl.BlockSpec((batch_tile, 1), lambda i, j: (i, 0)),
            ],
            out_specs=pl.BlockSpec((batch_tile, 1), lambda i, j: (i, 0)),
            scratch_shapes=[
                pltpu.VMEM((batch_tile, 1), jnp.float32),   # running max
                pltpu.VMEM((batch_tile, 1), jnp.float32),   # running sum-exp
                pltpu.VMEM((batch_tile, 1), jnp.float32),   # sum of logits
                pltpu.VMEM((batch_tile, 1), jnp.float32),   # target logit
            ],
        ),
        compiler_params=pltpu.CompilerParams(
            dimension_semantics=("parallel", "arbitrary"),
            vmem_limit_bytes=vmem_limit_bytes),
    )(inputs, targets_col)

    # Final tiny reduction (and 1/B with the *true* batch size) in JAX.
    return jnp.sum(per_row[:B, 0]) * (1.0 / B)


def _reference(inputs, targets, num_classes, epsilon=0.1):
    x = inputs.astype(jnp.float32)
    log_probs = jax.nn.log_softmax(x, axis=1)
    onehot = jax.nn.one_hot(targets, num_classes, dtype=jnp.float32)
    smooth = (1.0 - epsilon) * onehot + epsilon / num_classes
    return jnp.sum(jnp.mean(-smooth * log_probs, axis=0))


if __name__ == "__main__":
    key = jax.random.PRNGKey(0)
    epsilon = 0.1

    # Case 1: exercises both grid axes (2 batch tiles x 4 class tiles),
    # dense (unmasked) class path.
    B, C = 16, 512
    k1, k2 = jax.random.split(key)
    inputs = jax.random.normal(k1, (B, C), dtype=jnp.float32)
    targets = jax.random.randint(k2, (B,), 0, C, dtype=jnp.int32)
    loss = cross_entropy_label_smooth(
        inputs, targets, num_classes=C, epsilon=epsilon,
        batch_tile=8, class_tile=128)
    loss = jax.block_until_ready(loss)
    ref = _reference(inputs, targets, C, epsilon)
    assert jnp.allclose(loss, ref, atol=1e-5, rtol=1e-5), (loss, ref)

    # Case 2: ragged class dim (masking gated to the last class step) and
    # ragged batch (padding path).
    B2, C2 = 10, 200
    k3, k4 = jax.random.split(k2)
    inputs2 = jax.random.normal(k3, (B2, C2), dtype=jnp.float32)
    targets2 = jax.random.randint(k4, (B2,), 0, C2, dtype=jnp.int32)
    loss2 = cross_entropy_label_smooth(
        inputs2, targets2, num_classes=C2, epsilon=epsilon,
        batch_tile=8, class_tile=128)
    loss2 = jax.block_until_ready(loss2)
    ref2 = _reference(inputs2, targets2, C2, epsilon)
    assert jnp.allclose(loss2, ref2, atol=1e-5, rtol=1e-5), (loss2, ref2)

    # Case 3: auto-picked tiles (VMEM-aware, >=2 batch tiles) with bf16
    # logits (halved HBM traffic; math stays f32 in-kernel).
    B3, C3 = 32, 384
    k5, k6 = jax.random.split(k4)
    inputs3 = jax.random.normal(k5, (B3, C3), dtype=jnp.float32).astype(jnp.bfloat16)
    targets3 = jax.random.randint(k6, (B3,), 0, C3, dtype=jnp.int32)
    loss3 = cross_entropy_label_smooth(
        inputs3, targets3, num_classes=C3, epsilon=epsilon)
    loss3 = jax.block_until_ready(loss3)
    ref3 = _reference(inputs3, targets3, C3, epsilon)
    assert jnp.allclose(loss3, ref3, atol=1e-4, rtol=1e-4), (loss3, ref3)

    print("KERNEL_OK")
</pallas_src>

<mosaic_0001>
module attributes {stable_mosaic.version = 11 : i64} {
  func.func @_ce_label_smooth_kernel(%arg0: i32, %arg1: i32, %arg2: memref<8x128xf32, #tpu.memory_space<vmem>>, %arg3: memref<8x1xi32, #tpu.memory_space<vmem>>, %arg4: memref<8x1xf32, #tpu.memory_space<vmem>>, %arg5: memref<8x1xf32, #tpu.memory_space<vmem>>, %arg6: memref<8x1xf32, #tpu.memory_space<vmem>>, %arg7: memref<8x1xf32, #tpu.memory_space<vmem>>, %arg8: memref<8x1xf32, #tpu.memory_space<vmem>>) attributes {dimension_semantics = [#tpu.dimension_semantics<parallel>, #tpu.dimension_semantics<arbitrary>], iteration_bounds = array<i64: 2, 4>, scalar_prefetch = 0 : i64, scratch_operands = 4 : i64, tpu.core_type = #tpu.core_type<tc>, window_params = [{transform_indices = @transform_0, window_bounds = array<i64: 8, 128>}, {transform_indices = @transform_1, window_bounds = array<i64: 8, 1>}, {transform_indices = @transform_2, window_bounds = array<i64: 8, 1>}]} {
    %c0_i32 = arith.constant 0 : i32
    %0 = arith.cmpi eq, %arg1, %c0_i32 : i32
    %1 = arith.extui %0 : i1 to i32
    %c0_i32_0 = arith.constant 0 : i32
    %2 = arith.cmpi ne, %1, %c0_i32_0 : i32
    scf.if %2 {
      %cst_25 = arith.constant 0xFF800000 : f32
      %42 = vector.broadcast %cst_25 : f32 to vector<8x1xf32>
      %c0_26 = arith.constant 0 : index
      %c0_27 = arith.constant 0 : index
      %43 = vector.load %arg5[%c0_26, %c0_27] : memref<8x1xf32, #tpu.memory_space<vmem>>, vector<8x1xf32>
      tpu.vector_store %arg5[%c0_26, %c0_27], %42 {strides = array<i32>} : memref<8x1xf32, #tpu.memory_space<vmem>>, vector<8x1xf32>,
      %cst_28 = arith.constant 0.000000e+00 : f32
      %44 = vector.broadcast %cst_28 : f32 to vector<8x1xf32>
      %c0_29 = arith.constant 0 : index
      %c0_30 = arith.constant 0 : index
      %45 = vector.load %arg6[%c0_29, %c0_30] : memref<8x1xf32, #tpu.memory_space<vmem>>, vector<8x1xf32>
      tpu.vector_store %arg6[%c0_29, %c0_30], %44 {strides = array<i32>} : memref<8x1xf32, #tpu.memory_space<vmem>>, vector<8x1xf32>,
      %cst_31 = arith.constant 0.000000e+00 : f32
      %46 = vector.broadcast %cst_31 : f32 to vector<8x1xf32>
      %c0_32 = arith.constant 0 : index
      %c0_33 = arith.constant 0 : index
      %47 = vector.load %arg7[%c0_32, %c0_33] : memref<8x1xf32, #tpu.memory_space<vmem>>, vector<8x1xf32>
      tpu.vector_store %arg7[%c0_32, %c0_33], %46 {strides = array<i32>} : memref<8x1xf32, #tpu.memory_space<vmem>>, vector<8x1xf32>,
      %cst_34 = arith.constant 0.000000e+00 : f32
      %48 = vector.broadcast %cst_34 : f32 to vector<8x1xf32>
      %c0_35 = arith.constant 0 : index
      %c0_36 = arith.constant 0 : index
      %49 = vector.load %arg8[%c0_35, %c0_36] : memref<8x1xf32, #tpu.memory_space<vmem>>, vector<8x1xf32>
      tpu.vector_store %arg8[%c0_35, %c0_36], %48 {strides = array<i32>} : memref<8x1xf32, #tpu.memory_space<vmem>>, vector<8x1xf32>,
    } else {
    }
    %c0 = arith.constant 0 : index
    %c0_1 = arith.constant 0 : index
    %3 = vector.load %arg2[%c0, %c0_1] : memref<8x128xf32, #tpu.memory_space<vmem>>, vector<8x128xf32>
    %4 = tpu.iota {dimensions = array<i32: 1>} : vector<8x128xi32>
    %c0_2 = arith.constant 0 : index
    %c0_3 = arith.constant 0 : index
    %5 = vector.load %arg3[%c0_2, %c0_3] : memref<8x1xi32, #tpu.memory_space<vmem>>, vector<8x1xi32>
    %c128_i32 = arith.constant 128 : i32
    %6 = arith.muli %arg1, %c128_i32 : i32
    %7 = vector.broadcast %6 : i32 to vector<8x1xi32>
    %8 = arith.subi %5, %7 : vector<8x1xi32>
    %9 = vector.broadcast %8 : vector<8x1xi32> to vector<8x128xi32>
    %10 = arith.cmpi eq, %4, %9 : vector<8x128xi32>
    %c0_4 = arith.constant 0 : index
    %c0_5 = arith.constant 0 : index
    %11 = vector.load %arg8[%c0_4, %c0_5] : memref<8x1xf32, #tpu.memory_space<vmem>>, vector<8x1xf32>
    %cst = arith.constant 0.000000e+00 : f32
    %12 = vector.broadcast %cst : f32 to vector<8x128xf32>
    %13 = arith.select %10, %3, %12 : vector<8x128xi1>, vector<8x128xf32>
    %cst_6 = arith.constant dense<0.000000e+00> : vector<8xf32>
    %14 = vector.multi_reduction <add>, %13, %cst_6 [1] : vector<8x128xf32> to vector<8xf32>
    %15 = vector.shape_cast %14 : vector<8xf32> to vector<8x1xf32>
    %16 = arith.addf %11, %15 : vector<8x1xf32>
    %c0_7 = arith.constant 0 : index
    %c0_8 = arith.constant 0 : index
    %17 = vector.load %arg8[%c0_7, %c0_8] : memref<8x1xf32, #tpu.memory_space<vmem>>, vector<8x1xf32>
    tpu.vector_store %arg8[%c0_7, %c0_8], %16 {strides = array<i32>} : memref<8x1xf32, #tpu.memory_space<vmem>>, vector<8x1xf32>,
    %c0_9 = arith.constant 0 : index
    %c0_10 = arith.constant 0 : index
    %18 = vector.load %arg5[%c0_9, %c0_10] : memref<8x1xf32, #tpu.memory_space<vmem>>, vector<8x1xf32>
    %cst_11 = arith.constant dense<0xFF800000> : vector<8xf32>
    %19 = vector.multi_reduction <maximumf>, %3, %cst_11 [1] : vector<8x128xf32> to vector<8xf32>
    %20 = vector.shape_cast %19 : vector<8xf32> to vector<8x1xf32>
    %21 = arith.maximumf %18, %20 : vector<8x1xf32>
    %22 = arith.subf %18, %21 : vector<8x1xf32>
    %23 = math.exp %22 : vector<8x1xf32>
    %24 = vector.broadcast %21 : vector<8x1xf32> to vector<8x128xf32>
    %25 = arith.subf %3, %24 : vector<8x128xf32>
    %26 = math.exp %25 : vector<8x128xf32>
    %c0_12 = arith.constant 0 : index
    %c0_13 = arith.constant 0 : index
    %27 = vector.load %arg6[%c0_12, %c0_13] : memref<8x1xf32, #tpu.memory_space<vmem>>, vector<8x1xf32>
    %28 = arith.mulf %23, %27 : vector<8x1xf32>
    %cst_14 = arith.constant dense<0.000000e+00> : vector<8xf32>
    %29 = vector.multi_reduction <add>, %26, %cst_14 [1] : vector<8x128xf32> to vector<8xf32>
    %30 = vector.shape_cast %29 : vector<8xf32> to vector<8x1xf32>
    %31 = arith.addf %28, %30 : vector<8x1xf32>
    %c0_15 = arith.constant 0 : index
    %c0_16 = arith.constant 0 : index
    %32 = vector.load %arg6[%c0_15, %c0_16] : memref<8x1xf32, #tpu.memory_space<vmem>>, vector<8x1xf32>
    tpu.vector_store %arg6[%c0_15, %c0_16], %31 {strides = array<i32>} : memref<8x1xf32, #tpu.memory_space<vmem>>, vector<8x1xf32>,
    %c0_17 = arith.constant 0 : index
    %c0_18 = arith.constant 0 : index
    %33 = vector.load %arg5[%c0_17, %c0_18] : memref<8x1xf32, #tpu.memory_space<vmem>>, vector<8x1xf32>
    tpu.vector_store %arg5[%c0_17, %c0_18], %21 {strides = array<i32>} : memref<8x1xf32, #tpu.memory_space<vmem>>, vector<8x1xf32>,
    %c0_19 = arith.constant 0 : index
    %c0_20 = arith.constant 0 : index
    %34 = vector.load %arg7[%c0_19, %c0_20] : memref<8x1xf32, #tpu.memory_space<vmem>>, vector<8x1xf32>
    %cst_21 = arith.constant dense<0.000000e+00> : vector<8xf32>
    %35 = vector.multi_reduction <add>, %3, %cst_21 [1] : vector<8x128xf32> to vector<8xf32>
    %36 = vector.shape_cast %35 : vector<8xf32> to vector<8x1xf32>
    %37 = arith.addf %34, %36 : vector<8x1xf32>
    %c0_22 = arith.constant 0 : index
    %c0_23 = arith.constant 0 : index
    %38 = vector.load %arg7[%c0_22, %c0_23] : memref<8x1xf32, #tpu.memory_space<vmem>>, vector<8x1xf32>
    tpu.vector_store %arg7[%c0_22, %c0_23], %37 {strides = array<i32>} : memref<8x1xf32, #tpu.memory_space<vmem>>, vector<8x1xf32>,
    %c3_i32 = arith.constant 3 : i32
    %39 = arith.cmpi eq, %arg1, %c3_i32 : i32
    %40 = arith.extui %39 : i1 to i32
    %c0_i32_24 = arith.constant 0 : i32
    %41 = arith.cmpi ne, %40, %c0_i32_24 : i32
    scf.if %41 {
      %c0_25 = arith.constant 0 : index
      %c0_26 = arith.constant 0 : index
      %42 = vector.load %arg5[%c0_25, %c0_26] : memref<8x1xf32, #tpu.memory_space<vmem>>, vector<8x1xf32>
      %c0_27 = arith.constant 0 : index
      %c0_28 = arith.constant 0 : index
      %43 = vector.load %arg6[%c0_27, %c0_28] : memref<8x1xf32, #tpu.memory_space<vmem>>, vector<8x1xf32>
      %44 = math.log %43 : vector<8x1xf32>
      %45 = arith.addf %42, %44 : vector<8x1xf32>
      %c0_29 = arith.constant 0 : index
      %c0_30 = arith.constant 0 : index
      %46 = vector.load %arg8[%c0_29, %c0_30] : memref<8x1xf32, #tpu.memory_space<vmem>>, vector<8x1xf32>
      %47 = arith.subf %46, %45 : vector<8x1xf32>
      %cst_31 = arith.constant 0.899999976 : f32
      %48 = vector.broadcast %cst_31 : f32 to vector<8x1xf32>
      %49 = arith.mulf %48, %47 : vector<8x1xf32>
      %c0_32 = arith.constant 0 : index
      %c0_33 = arith.constant 0 : index
      %50 = vector.load %arg7[%c0_32, %c0_33] : memref<8x1xf32, #tpu.memory_space<vmem>>, vector<8x1xf32>
      %cst_34 = arith.constant 5.120000e+02 : f32
      %51 = vector.broadcast %cst_34 : f32 to vector<8x1xf32>
      %52 = arith.mulf %51, %45 : vector<8x1xf32>
      %53 = arith.subf %50, %52 : vector<8x1xf32>
      %cst_35 = arith.constant 1.95312503E-4 : f32
      %54 = vector.broadcast %cst_35 : f32 to vector<8x1xf32>
      %55 = arith.mulf %54, %53 : vector<8x1xf32>
      %56 = arith.addf %49, %55 : vector<8x1xf32>
      %cst_36 = arith.constant 0.000000e+00 : f32
      %57 = vector.broadcast %cst_36 : f32 to vector<8x1xf32>
      %58 = arith.subf %57, %56 : vector<8x1xf32>
      %c0_37 = arith.constant 0 : index
      %c0_38 = arith.constant 0 : index
      %59 = vector.load %arg4[%c0_37, %c0_38] : memref<8x1xf32, #tpu.memory_space<vmem>>, vector<8x1xf32>
      tpu.vector_store %arg4[%c0_37, %c0_38], %58 {strides = array<i32>} : memref<8x1xf32, #tpu.memory_space<vmem>>, vector<8x1xf32>,
    } else {
    }
    return
  }
  func.func @transform_0(%arg0: i32, %arg1: i32) -> (i32, i32) {
    %c0_i32 = arith.constant 0 : i32
    return %arg0, %arg1 : i32, i32
  }
  func.func @transform_1(%arg0: i32, %arg1: i32) -> (i32, i32) {
    %c0_i32 = arith.constant 0 : i32
    %c0_i32_0 = arith.constant 0 : i32
    return %arg0, %c0_i32 : i32, i32
  }
  func.func @transform_2(%arg0: i32, %arg1: i32) -> (i32, i32) {
    %c0_i32 = arith.constant 0 : i32
    %c0_i32_0 = arith.constant 0 : i32
    return %arg0, %c0_i32 : i32, i32
  }
}

</mosaic_0001>

<llo_original>
// kernel: tpu_custom_call.1
$region0: #{tpu_custom_call.1}
  #allocation0 [shape = 'u32[]', space=smem, size = 0x4, offset = 0x4, fixed_abs, tag = 'smem constant byte address 0x4 - core index']
  #allocation1 [shape = 'u32[144,128]{1,0:T(1,128)}', space=vmem, size = 0x12000, scoped, tag = 'internal scratch']
  #allocation2 [shape = 'f32[8,1]{1,0:T(8,128)}', space=vmem, size = 0x1000, scoped, tag = 'scratch operand']
  #allocation3 [shape = 'f32[8,1]{1,0:T(8,128)}', space=vmem, size = 0x1000, scoped, tag = 'scratch operand']
  #allocation4 [shape = 'f32[8,1]{1,0:T(8,128)}', space=vmem, size = 0x1000, scoped, tag = 'scratch operand']
  #allocation5 [shape = 'f32[8,1]{1,0:T(8,128)}', space=vmem, size = 0x1000, scoped, tag = 'scratch operand']
  %s0 = inlined_call_operand.hbm [shape: f32[16,512], index: 0, kind: input, shape index: {}]
  %s1 = inlined_call_operand.vmem [shape: s32[16,1], index: 1, kind: input, shape index: {}]
  %s2 = inlined_call_operand.vmem [shape: f32[16,1], index: 2, kind: output, shape index: {}]
  %s3 = sld [smem:[#allocation0]]
  $region53: #{tpu_custom_call.1} parent=0
    _
  %s5 = ssub.s32 1, %s3
  %s6 = scalar_select 0, %s5, %s3
  $region1: #{tpu_custom_call.1} parent=0
    #allocation6 [shape = 'u8[8192]{0}', space=vmem, size = 0x2000, scoped, tag = 'input window, operand 0']
    #allocation7 [shape = 's32[2]{0}', space=sflag, size = 0x8, scoped, tag = 'scoped memory for tpu_custom_call.1']
    %7 = vsyncpa [#allocation7], 0
    %s8 = scalar_lea.sflag [#allocation7], 1
    %9 = vsyncpa %s8, 0
    loop: start=0, step=1, limit=10
    $region2: #{tpu_custom_call.1} parent=1 // loop_pre_header
      _
    $region3: #{tpu_custom_call.1} parent=1 // loop_header
      %s11 = sphi 0, %s15
      %p12 = scmp.ge.s32.totalorder %s11, 10
      %s18 = sphi 0, %s30
      %s19 = sphi 0, %s26
      %s20 = sphi 0, %s18
      %s21 = sphi 0, %s19
      %s22 = sphi 0, %s20
      %s23 = sphi 0, %s21
      %s35 = sphi 0, %s37
      %s38 = sphi 0, %s35
      %s39 = sphi 0, %s38
      %s55 = sphi 0, %s39
      %s61 = sphi 0, %s63
      %s64 = sphi 0, %s61
      %s65 = sphi 0, %s64
      %s81 = sphi 0, %s65
      %s87 = sphi 0, %s89
      %s90 = sphi 0, %s87
      %s91 = sphi 0, %s90
      %s107 = sphi 0, %s91
    $region4: #{tpu_custom_call.1} parent=1 // loop_header_branch
      %14 = sbr.rel (%p12) target = $region8
    $region5: #{tpu_custom_call.1} parent=1 // loop_body
      %s16 = ssub.s32 %s11, 1
      %s17 = ssub.s32 %s11, 2
      %s24 = sadd.s32 1, %s19
      %p25 = scmp.ge.s32.totalorder %s24, 4
      %s26 = scalar_select %p25, 0, %s24
      %s27 = sadd.s32 1, %s18
      %s28 = scalar_select %p25, %s27, %s18
      %p29 = scmp.ge.s32.totalorder %s28, 2
      %s30 = scalar_select %p29, 0, %s28
      %s31 = ssub.s32 %s18, %s30
      %s32 = ssub.s32 %s19, %s26
      %s33 = sor.u32 %s31, %s32
      %p34 = scmp.eq.s32.totalorder %s33, 0
      %s36 = sadd.s32 %s35, 1
      %s37 = scalar_select %p34, %s35, %s36
      %p40 = pneg %p34
      %p41 = scmp.eq.s32.totalorder %s11, 7
      %p42 = por %p40, %p41
      %p43 = scmp.ne.s32.totalorder %s35, %s38
      %p44 = scmp.eq.s32.totalorder %s11, 0
      %p45 = por %p43, %p44
      %p46 = scmp.ne.s32.totalorder %s35, %s38
      %p47 = scmp.eq.s32.totalorder %s16, 7
      %p48 = por %p46, %p47
      %p49 = scmp.ne.s32.totalorder %s38, %s39
      %p50 = scmp.eq.s32.totalorder %s16, 0
      %p51 = por %p49, %p50
      %p52 = scmp.ne.s32.totalorder %s38, %s39
      %p53 = scmp.eq.s32.totalorder %s17, 7
      %p54 = por %p52, %p53
      %p56 = scmp.ne.s32.totalorder %s39, %s55
      %p57 = scmp.eq.s32.totalorder %s17, 0
      %p58 = por %p56, %p57
      %s59 = ssub.s32 %s18, %s30
      %p60 = scmp.eq.s32.totalorder %s59, 0
      %s62 = sadd.s32 %s61, 1
      %s63 = scalar_select %p60, %s61, %s62
      %p66 = pneg %p60
      %p67 = scmp.eq.s32.totalorder %s11, 7
      %p68 = por %p66, %p67
      %p69 = scmp.ne.s32.totalorder %s61, %s64
      %p70 = scmp.eq.s32.totalorder %s11, 0
      %p71 = por %p69, %p70
      %p72 = scmp.ne.s32.totalorder %s61, %s64
      %p73 = scmp.eq.s32.totalorder %s16, 7
      %p74 = por %p72, %p73
      %p75 = scmp.ne.s32.totalorder %s64, %s65
      %p76 = scmp.eq.s32.totalorder %s16, 0
      %p77 = por %p75, %p76
      %p78 = scmp.ne.s32.totalorder %s64, %s65
      %p79 = scmp.eq.s32.totalorder %s17, 7
      %p80 = por %p78, %p79
      %p82 = scmp.ne.s32.totalorder %s65, %s81
      %p83 = scmp.eq.s32.totalorder %s17, 0
      %p84 = por %p82, %p83
      %s85 = ssub.s32 %s18, %s30
      %p86 = scmp.eq.s32.totalorder %s85, 0
      %s88 = sadd.s32 %s87, 1
      %s89 = scalar_select %p86, %s87, %s88
      %p92 = pneg %p86
      %p93 = scmp.eq.s32.totalorder %s11, 7
      %p94 = por %p92, %p93
      %p95 = scmp.ne.s32.totalorder %s87, %s90
      %p96 = scmp.eq.s32.totalorder %s11, 0
      %p97 = por %p95, %p96
      %p98 = scmp.ne.s32.totalorder %s87, %s90
      %p99 = scmp.eq.s32.totalorder %s16, 7
      %p100 = por %p98, %p99
      %p101 = scmp.ne.s32.totalorder %s90, %s91
      %p102 = scmp.eq.s32.totalorder %s16, 0
      %p103 = por %p101, %p102
      %p104 = scmp.ne.s32.totalorder %s90, %s91
      %p105 = scmp.eq.s32.totalorder %s17, 7
      %p106 = por %p104, %p105
      %p108 = scmp.ne.s32.totalorder %s91, %s107
      %p109 = scmp.eq.s32.totalorder %s17, 0
      %p110 = por %p108, %p109
      %p111 = scmp.le.s32.totalorder 1, %s11
      %p112 = scmp.lt.s32.totalorder %s11, 9
      %p113 = pnand %p111, %p112
      %p114 = pneg %p113
      // Predicated region
      $region9: #{tpu_custom_call.1} parent=5 // pred_check
        _
      $region10: #{tpu_custom_call.1} parent=5 // pred_check_branch
        %116 = sbr.rel (%p113) target = $region12
      $region11: #{tpu_custom_call.1} parent=5 // pred_region
        %s117 = ssub.s32 %s11, 1
      $region12: #{tpu_custom_call.1} parent=5 // pred_fallthru
        _
      %p118 = scmp.lt.s32.totalorder %s11, 8
      // Predicated region
      $region13: #{tpu_custom_call.1} parent=5 // pred_check
        %p119 = pneg %p118
      $region14: #{tpu_custom_call.1} parent=5 // pred_check_branch
        %121 = sbr.rel (%p119) target = $region16
      $region15: #{tpu_custom_call.1} parent=5 // pred_region
        // Predicated region
        $region17: #{tpu_custom_call.1} parent=15 // pred_check
          %p122 = pneg %p45
        $region18: #{tpu_custom_call.1} parent=15 // pred_check_branch
          %124 = sbr.rel (%p122) target = $region20
        $region19: #{tpu_custom_call.1} parent=15 // pred_region
          %s125 = sand.u32 %s35, 1
          %s126 = scalar_lea.sflag [#allocation7], %s125
          %s127 = sand.u32 %s35, 1
          %s128 = smul.addr %s127, 8
          %s129 = scalar_lea.vmem [#allocation6], %s128
          %s131 = ssub.s32 128, 128
          %132 = vsyncadd %s126, %s131
          %s133 = smul.addr %s18, 4
          %s134 = sadd.s32 %s19, %s133
          %s135 = smul.addr %s134, 128
          %s136 = scalar_lea.hbm %s0, %s135
          %s138 = sshll.u32 %s129, 4
          %s139 = int_to_ptr.vmem [resolvable:$true] %s138
          %141 = dma.hbm_to_vmem [thread:$0]  %s136, 128, %s139, %s126
        $region20: #{tpu_custom_call.1} parent=15 // pred_fallthru
          _
        // Predicated region
        $region21: #{tpu_custom_call.1} parent=15 // pred_check
          %p142 = pneg %p71
        $region22: #{tpu_custom_call.1} parent=15 // pred_check_branch
          %144 = sbr.rel (%p142) target = $region24
        $region23: #{tpu_custom_call.1} parent=15 // pred_region
          %p145 = scmp.lt.s32.totalorder %s18, 1
          %s146 = scalar_select %p145, %s18, 1
          %s147 = smul.addr %s146, 8
          %s148 = scalar_lea.vmem %s1, %s147
        $region24: #{tpu_custom_call.1} parent=15 // pred_fallthru
          _
      $region16: #{tpu_custom_call.1} parent=5 // pred_fallthru
        _
      %p149 = scmp.le.s32.totalorder 1, %s11
      %p150 = scmp.lt.s32.totalorder %s11, 9
      %p151 = pnand %p149, %p150
      %p152 = pneg %p151
      // Predicated region
      $region25: #{tpu_custom_call.1} parent=5 // pred_check
        _
      $region26: #{tpu_custom_call.1} parent=5 // pred_check_branch
        %154 = sbr.rel (%p151) target = $region28
      $region27: #{tpu_custom_call.1} parent=5 // pred_region
        %s155 = ssub.s32 %s11, 1
        %s156 = sand.u32 %s38, 1
        %s157 = scalar_lea.sflag [#allocation7], %s156
        %s158 = sand.u32 %s38, 1
        %s159 = smul.addr %s158, 8
        %s160 = scalar_lea.vmem [#allocation6], %s159
        // Predicated region
        $region29: #{tpu_custom_call.1} parent=27 // pred_check
          %p161 = pneg %p51
        $region30: #{tpu_custom_call.1} parent=27 // pred_check_branch
          %163 = sbr.rel (%p161) target = $region32
        $region31: #{tpu_custom_call.1} parent=27 // pred_region
          %164 = dma.done %s157, 128
        $region32: #{tpu_custom_call.1} parent=27 // pred_fallthru
          _
        %s165 = sand.u32 %s38, 1
        %s166 = scalar_lea.sflag [#allocation7], %s165
        %s167 = sand.u32 %s38, 1
        %s168 = smul.addr %s167, 8
        %s169 = scalar_lea.vmem [#allocation6], %s168
        %p170 = pneg %p51
        %p171 = pneg %p48
        %p172 = scmp.lt.s32.totalorder %s20, 1
        %s173 = scalar_select %p172, %s20, 1
        %s174 = smul.addr %s173, 8
        %s175 = scalar_lea.vmem %s1, %s174
        %p176 = pneg %p77
        %p177 = pneg %p74
        %p178 = pneg %p103
        %p179 = pneg %p100
        %p180 = scmp.lt.s32.totalorder %s20, 1
        %s181 = scalar_select %p180, %s20, 1
        %s182 = smul.addr %s181, 8
        %s183 = scalar_lea.vmem %s2, %s182
        %p184 = scmp.lt.s32.totalorder %s20, 1
        %s185 = scalar_select %p184, %s20, 1
        %s186 = smul.addr %s185, 8
        %s187 = scalar_lea.vmem %s1, %s186
        %p188 = scmp.lt.s32.totalorder %s20, 1
        %s189 = scalar_select %p188, %s20, 1
        %s190 = smul.addr %s189, 8
        %s191 = scalar_lea.vmem %s2, %s190
        %p192 = scmp.eq.s32.totalorder %s21, 0
        // Predicated region
        $region33: #{tpu_custom_call.1} parent=27 // pred_check
          %p193 = pneg %p192
        $region34: #{tpu_custom_call.1} parent=27 // pred_check_branch
          %195 = sbr.rel (%p193) target = $region36
        $region35: #{tpu_custom_call.1} parent=27 // pred_region
          %vm196 = vcmask 7168
          %197 = vst.msk [vmem:[#allocation2] sm:$0xff] %vm196, -inf
          %198 = vst.msk [vmem:[#allocation3] sm:$0xff] %vm196, 0.0
          %199 = vst.msk [vmem:[#allocation4] sm:$0xff] %vm196, 0.0
          %200 = vst.msk [vmem:[#allocation5] sm:$0xff] %vm196, 0.0
        $region36: #{tpu_custom_call.1} parent=27 // pred_fallthru
          _
        %v201 = vld [vmem:[%s160] sm:$0xff]
        %v202 = vlaneseq
        %v203 = vand.u32 %v202, 127
        %v204 = vld [vmem:[%s187] sm:$0xff]
        %s205 = smul.u32 %s21, 128
        %v206 = vstv %s205
        %v207 = vsub.s32 %v204, %v206
        %208 = vset.pattern.permute.xlu0 0
        %209 = vperm.xlu0 %208, %v207
        %v210 = vpop.permute.xlu0 %209
        %vm211 = vcmp.eq.s32.totalorder %v203, %v210
        %v212 = vld [vmem:[#allocation5] sm:$0xff]
        %v213 = vsel %vm211, %v201, 0.0
        %214 = vadd.xlane.f32.xlu0 %v213
        %v215 = vpop.xlane.xlu0 %214
        %v216 = vadd.f32 %v212, %v215
        %vm217 = vcmask 7168
        %218 = vst.msk [vmem:[#allocation5] sm:$0xff] %vm217, %v216
        %v219 = vld [vmem:[#allocation2] sm:$0xff]
        %220 = vmax.xlane.f32.xlu0 %v201
        %v221 = vpop.xlane.xlu0 %220
        %v222 = vmax.f32 %v219, %v221
        %v223 = vsub.f32 %v219, %v222
        %v224 = vmul.f32 %v223, 1.442695
        %v225 = vpow.pop %v224
        %227 = vset.pattern.permute.xlu0 0
        %228 = vperm.xlu0 %227, %v222
        %v229 = vpop.permute.xlu0 %228
        %v231 = vsub.f32 %v201, %v229
        %v232 = vmul.f32 %v231, 1.442695
        %v233 = vpow.pop %v232
        %v234 = vld [vmem:[#allocation3] sm:$0xff]
        %v235 = vmul.f32 %v225, %v234
        %236 = vadd.xlane.f32.xlu0 %v233
        %v237 = vpop.xlane.xlu0 %236
        %v238 = vadd.f32 %v235, %v237
        %239 = vst.msk [vmem:[#allocation3] sm:$0xff] %vm217, %v238
        %240 = vst.msk [vmem:[#allocation2] sm:$0xff] %vm217, %v222
        %v241 = vld [vmem:[#allocation4] sm:$0xff]
        %242 = vadd.xlane.f32.xlu0 %v201
        %v243 = vpop.xlane.xlu0 %242
        %v244 = vadd.f32 %v241, %v243
        %245 = vst.msk [vmem:[#allocation4] sm:$0xff] %vm217, %v244
        %p246 = scmp.eq.s32.totalorder %s21, 3
        // Predicated region
        $region37: #{tpu_custom_call.1} parent=27 // pred_check
          %p247 = pneg %p246
        $region38: #{tpu_custom_call.1} parent=27 // pred_check_branch
          %249 = sbr.rel (%p247) target = $region40
        $region39: #{tpu_custom_call.1} parent=27 // pred_region
          %v250 = vld [vmem:[#allocation2] sm:$0xff]
          %v251 = vld [vmem:[#allocation3] sm:$0xff]
          %v252 = vlog2.pop %v251
          %v253 = vmul.f32 %v252, 0.6931472
          %v254 = vadd.f32 %v250, %v253
          %v255 = vld [vmem:[#allocation5] sm:$0xff]
          %v256 = vsub.f32 %v255, %v254
          %v257 = vmul.f32 %v256, 0.9
          %v258 = vld [vmem:[#allocation4] sm:$0xff]
          %v259 = vmul.f32 %v254, 512.0
          %v260 = vsub.f32 %v258, %v259
          %v261 = vmul.f32 %v260, 0.0001953125
          %v262 = vadd.f32 %v257, %v261
          %v263 = vsub.f32 0.0, %v262
          %264 = vst.msk [vmem:[%s191] sm:$0xff] %vm217, %v263
        $region40: #{tpu_custom_call.1} parent=27 // pred_fallthru
          _
        %p265 = scmp.lt.s32.totalorder %s20, 1
        %s266 = scalar_select %p265, %s20, 1
        %s267 = smul.addr %s266, 8
        %s268 = scalar_lea.vmem %s2, %s267
        // Predicated region
        $region41: #{tpu_custom_call.1} parent=27 // pred_check
          %p269 = pneg %p100
        $region42: #{tpu_custom_call.1} parent=27 // pred_check_branch
          %271 = sbr.rel (%p269) target = $region44
        $region43: #{tpu_custom_call.1} parent=27 // pred_region
          _
        $region44: #{tpu_custom_call.1} parent=27 // pred_fallthru
          _
      $region28: #{tpu_custom_call.1} parent=5 // pred_fallthru
        _
      %p272 = scmp.le.s32.totalorder 2, %s11
      // Predicated region
      $region45: #{tpu_custom_call.1} parent=5 // pred_check
        %p273 = pneg %p272
      $region46: #{tpu_custom_call.1} parent=5 // pred_check_branch
        %275 = sbr.rel (%p273) target = $region48
      $region47: #{tpu_custom_call.1} parent=5 // pred_region
        %s276 = ssub.s32 %s11, 2
        // Predicated region
        $region49: #{tpu_custom_call.1} parent=47 // pred_check
          %p277 = pneg %p106
        $region50: #{tpu_custom_call.1} parent=47 // pred_check_branch
          %279 = sbr.rel (%p277) target = $region52
        $region51: #{tpu_custom_call.1} parent=47 // pred_region
          %p280 = scmp.lt.s32.totalorder %s22, 1
          %s281 = scalar_select %p280, %s22, 1
          %s282 = smul.addr %s281, 8
          %s283 = scalar_lea.vmem %s2, %s282
        $region52: #{tpu_custom_call.1} parent=47 // pred_fallthru
          _
      $region48: #{tpu_custom_call.1} parent=5 // pred_fallthru
        _
    $region6: #{tpu_custom_call.1} parent=1 // loop_footer
      %s15 = sadd.s32 1, %s11
    $region7: #{tpu_custom_call.1} parent=1 // loop_footer_branch
      %10 = sbr.rel target = $region3
    $region8: #{tpu_custom_call.1} parent=1 // loop_exit
      _
    %284 = vsyncpa [#allocation7], 1
    %s285 = scalar_lea.sflag [#allocation7], 1
    %286 = vsyncpa %s285, 1

</llo_original>
